<compile_context>
chip_gen: v7x
topology: tpu7x:2x2x1
jax: 0.10.0
libtpu: 0.0.40
codegen_flags: <defaults>
</compile_context>

<pallas_src>
import functools

import jax
import jax.numpy as jnp
from jax import lax
from jax.experimental import pallas as pl
from jax.experimental.pallas import tpu as pltpu

# Large finite negative bias (safer than -inf if a row were ever fully masked).
NEG_INF = -0.7 * float(jnp.finfo(jnp.float32).max)
_MIB = 1024 * 1024


def _round_up(x, m):
    return ((x + m - 1) // m) * m


def _vmem_capacity_bytes():
    """Physical VMEM per TensorCore; conservative fallback (v7x = 64 MiB)."""
    try:
        info = pltpu.get_tpu_info()
        cap = int(getattr(info, "vmem_capacity_bytes", 0))
        if cap > 0:
            return cap
    except Exception:
        pass
    return 64 * _MIB


def _flash_vmem_estimate(t, dp, elt_bytes):
    """Rough VMEM footprint of the flash kernel for a (t, t) tile pair."""
    io = 2 * 3 * t * dp * elt_bytes       # double-buffered q/k/v input tiles
    io += 2 * t * dp * 4                  # double-buffered f32 output tile
    scratch = t * dp * 4 + 2 * t * 4      # acc + m + l
    temps = 4 * t * t * 4                 # s / p / mask / iota temporaries
    return io + scratch + temps


def _pick_tile(T, dp, elt_bytes, vmem_cap, tile_cap=None):
    """Largest tile that divides T and keeps the working set well inside VMEM."""
    max_tile = 1024 if vmem_cap >= 100 * _MIB else 512     # 64 MiB/TC (v7x) -> smaller cap
    if tile_cap is not None:
        max_tile = min(max_tile, tile_cap)
    for t in (1024, 512, 256, 128):
        if (t <= max_tile and T >= t and T % t == 0       # '>=' fix: T==t uses tile t
                and _flash_vmem_estimate(t, dp, elt_bytes) <= vmem_cap // 2):
            return t
    return T   # toy / non-tileable sequence lengths: whole sequence as one tile


# ---------------------------------------------------------------------------
# Prologue: Q/K/V projection (once per token), scale folded into Wq.
# ---------------------------------------------------------------------------
def _qkv_proj_kernel(x_ref, w_ref, q_ref, k_ref, v_ref, *, dp):
    # x_ref: (1, tr, d_in); w_ref: (d_in, 3*dp) = [Wq*scale | Wk | Wv] zero-padded to dp.
    qkv = jnp.dot(x_ref[0], w_ref[...], preferred_element_type=jnp.float32)
    q_ref[0] = qkv[:, :dp].astype(q_ref.dtype)
    k_ref[0] = qkv[:, dp:2 * dp].astype(k_ref.dtype)
    v_ref[0] = qkv[:, 2 * dp:].astype(v_ref.dtype)


def _qkv_projection(x, wqkv, *, dp, tile, out_dtype):
    B, T, d_in = x.shape
    kernel = functools.partial(_qkv_proj_kernel, dp=dp)
    shape = jax.ShapeDtypeStruct((B, T, dp), out_dtype)
    return pl.pallas_call(
        kernel,
        out_shape=(shape, shape, shape),
        grid_spec=pltpu.PrefetchScalarGridSpec(
            num_scalar_prefetch=0,
            grid=(B, T // tile),
            in_specs=[
                pl.BlockSpec((1, tile, d_in), lambda b, i: (b, i, 0)),
                pl.BlockSpec((d_in, 3 * dp), lambda b, i: (0, 0)),
            ],
            out_specs=[
                pl.BlockSpec((1, tile, dp), lambda b, i: (b, i, 0)),
                pl.BlockSpec((1, tile, dp), lambda b, i: (b, i, 0)),
                pl.BlockSpec((1, tile, dp), lambda b, i: (b, i, 0)),
            ],
        ),
        compiler_params=pltpu.CompilerParams(
            dimension_semantics=("parallel", "parallel")),
    )(x, wqkv)


# ---------------------------------------------------------------------------
# Flash causal attention over the flattened lower-triangular tile-pair grid.
# ---------------------------------------------------------------------------
def _flash_causal_kernel(qi_map_ref, ki_map_ref, q_ref, k_ref, v_ref, o_ref,
                         m_sc, l_sc, acc_sc, *, tq, tk, approx_recip):
    pr = pl.program_id(1)
    qi = qi_map_ref[pr]
    ki = ki_map_ref[pr]

    @pl.when(ki == 0)
    def _init():
        m_sc[...] = jnp.full_like(m_sc, NEG_INF)
        l_sc[...] = jnp.zeros_like(l_sc)
        acc_sc[...] = jnp.zeros_like(acc_sc)

    # Scores without an explicit K transpose (contract the feature dims); bf16 operands,
    # f32 MXU accumulation.
    s = lax.dot_general(q_ref[0], k_ref[0], (((1,), (1,)), ((), ())),
                        preferred_element_type=jnp.float32)

    # Only the diagonal tile needs the causal mask (tq == tk => local indices suffice);
    # strictly-below-diagonal tiles are mask-free and above-diagonal tiles never run.
    row = lax.broadcasted_iota(jnp.int32, (tq, tk), 0)
    col = lax.broadcasted_iota(jnp.int32, (tq, tk), 1)
    s = jnp.where(jnp.logical_and(ki == qi, col > row), NEG_INF, s)

    # Online softmax (f32 bookkeeping — v5e has no bf16 VPU/EUP).
    m_prev = m_sc[...]
    m_new = jnp.maximum(m_prev, jnp.max(s, axis=-1, keepdims=True))
    alpha = jnp.exp(m_prev - m_new)
    p = jnp.exp(s - m_new)
    l_sc[...] = alpha * l_sc[...] + jnp.sum(p, axis=-1, keepdims=True)
    acc_sc[...] = alpha * acc_sc[...] + jnp.dot(
        p.astype(v_ref.dtype), v_ref[0], preferred_element_type=jnp.float32)
    m_sc[...] = m_new

    @pl.when(ki == qi)   # last real kv tile for this q tile
    def _finalize():
        inv_l = pl.reciprocal(l_sc[...], approx=approx_recip)
        o_ref[0] = (acc_sc[...] * inv_l).astype(o_ref.dtype)
        # Dropout on attn_weights: eval-mode identity.


def causal_attention(x, wq_t, wk_t, wv_t, *, mxu_dtype=jnp.bfloat16, tile_cap=None):
    """x: [B, T, d_in]; wq_t/wk_t/wv_t: [d_in, d_out] (torch weight transposed)."""
    B, T, d_in = x.shape
    d_out = wq_t.shape[1]
    scale = 1.0 / float(d_out) ** 0.5
    dp = max(128, _round_up(d_out, 128))       # lane-dense head width
    elt = jnp.dtype(mxu_dtype).itemsize
    approx_recip = jnp.dtype(mxu_dtype) == jnp.dtype(jnp.bfloat16)

    vmem_cap = _vmem_capacity_bytes()
    tq = _pick_tile(T, dp, elt, vmem_cap, tile_cap)
    nq = T // tq

    # Zero-pad weights to the lane-dense width; fold 1/sqrt(d_out) into Wq.
    def _pad(w):
        return jnp.pad(w.astype(jnp.float32), ((0, 0), (0, dp - d_out)))
    wqkv = jnp.concatenate([_pad(wq_t) * scale, _pad(wk_t), _pad(wv_t)], axis=1)

    # Projection prologue: Q/K/V computed once per token (not once per q tile).
    q, k, v = _qkv_projection(x, wqkv, dp=dp, tile=tq, out_dtype=mxu_dtype)

    # Flatten the lower-triangular (qi, ki) pairs into one grid axis: zero dead steps.
    qi_ids, ki_ids = [], []
    for qi_idx in range(nq):
        for ki_idx in range(qi_idx + 1):
            qi_ids.append(qi_idx)
            ki_ids.append(ki_idx)
    n_pairs = len(qi_ids)
    qi_map = jnp.asarray(qi_ids, dtype=jnp.int32)
    ki_map = jnp.asarray(ki_ids, dtype=jnp.int32)

    vmem_limit = int(min(max(2 * _flash_vmem_estimate(tq, dp, elt), 32 * _MIB),
                         vmem_cap * 3 // 4))

    kernel = functools.partial(_flash_causal_kernel, tq=tq, tk=tq,
                               approx_recip=approx_recip)

    cost = pl.CostEstimate(
        flops=int(B * n_pairs * 4 * tq * tq * dp + B * 2 * T * d_in * 3 * dp),
        transcendentals=int(B * n_pairs * tq * tq),
        bytes_accessed=int(B * (T * dp * elt + 2 * n_pairs * tq * dp * elt + T * dp * 4)),
    )

    out_padded = pl.pallas_call(
        kernel,
        out_shape=jax.ShapeDtypeStruct((B, T, dp), jnp.float32),
        grid_spec=pltpu.PrefetchScalarGridSpec(
            num_scalar_prefetch=2,
            grid=(B, n_pairs),
            in_specs=[
                pl.BlockSpec((1, tq, dp), lambda b, pr, qi_m, ki_m: (b, qi_m[pr], 0)),
                pl.BlockSpec((1, tq, dp), lambda b, pr, qi_m, ki_m: (b, ki_m[pr], 0)),
                pl.BlockSpec((1, tq, dp), lambda b, pr, qi_m, ki_m: (b, ki_m[pr], 0)),
            ],
            out_specs=pl.BlockSpec((1, tq, dp),
                                   lambda b, pr, qi_m, ki_m: (b, qi_m[pr], 0)),
            scratch_shapes=[
                pltpu.VMEM((tq, 1), jnp.float32),    # running row max
                pltpu.VMEM((tq, 1), jnp.float32),    # running denominator
                pltpu.VMEM((tq, dp), jnp.float32),   # running output accumulator
            ],
        ),
        compiler_params=pltpu.CompilerParams(
            # Batch axis "parallel": on v7x each TensorCore gets whole batches, so the
            # triangular kv workload is balanced across cores for B >= 2.  The pair axis
            # carries the online-softmax accumulator -> "arbitrary".
            dimension_semantics=("parallel", "arbitrary"),
            vmem_limit_bytes=vmem_limit,
        ),
        cost_estimate=cost,
    )(qi_map, ki_map, q, k, v)

    return out_padded[..., :d_out]


def reference(x, wq_t, wk_t, wv_t):
    q = x @ wq_t
    k = x @ wk_t
    v = x @ wv_t
    T = x.shape[1]
    scores = jnp.einsum("btd,bsd->bts", q, k)
    mask = jnp.triu(jnp.ones((T, T), dtype=bool), k=1)
    scores = jnp.where(mask[None], -jnp.inf, scores)
    w = jax.nn.softmax(scores / (k.shape[-1] ** 0.5), axis=-1)
    return jnp.einsum("bts,bsd->btd", w, v)


if __name__ == "__main__":
    # --- Test 1: exact shapes from the PyTorch snippet (B=2, T=6, d_in=3, d_out=2). ---
    inputs = jnp.array(
        [[0.43, 0.15, 0.89],
         [0.55, 0.87, 0.66],
         [0.57, 0.85, 0.64],
         [0.22, 0.58, 0.33],
         [0.77, 0.25, 0.10],
         [0.05, 0.80, 0.55]], dtype=jnp.float32)
    x = jnp.stack((inputs, inputs), axis=0)          # [B=2, T=6, d_in=3]

    d_in, d_out = 3, 2
    key = jax.random.PRNGKey(0)
    k1, k2, k3, k4, k5, k6, k7 = jax.random.split(key, 7)
    # nn.Linear weights are (d_out, d_in); forward is x @ W.T, so we pass W.T.
    bound = 1.0 / (d_in ** 0.5)
    w_query = jax.random.uniform(k1, (d_out, d_in), jnp.float32, -bound, bound)
    w_key_ = jax.random.uniform(k2, (d_out, d_in), jnp.float32, -bound, bound)
    w_value = jax.random.uniform(k3, (d_out, d_in), jnp.float32, -bound, bound)

    ref1 = reference(x, w_query.T, w_key_.T, w_value.T)

    out1_f32 = jax.block_until_ready(
        causal_attention(x, w_query.T, w_key_.T, w_value.T, mxu_dtype=jnp.float32))
    assert out1_f32.shape == (2, 6, 2)
    assert jnp.allclose(out1_f32, ref1, atol=1e-5, rtol=1e-5)

    out1_bf16 = jax.block_until_ready(
        causal_attention(x, w_query.T, w_key_.T, w_value.T))   # default bf16 MXU path
    assert out1_bf16.shape == (2, 6, 2)
    assert jnp.allclose(out1_bf16, ref1, atol=1e-2, rtol=1e-2)

    # --- Test 2: tiled path (multiple q/kv tiles, diagonal mask, triangular pair grid). ---
    B2, T2, din2, dout2 = 2, 256, 8, 32
    x2 = jax.random.normal(k4, (B2, T2, din2), jnp.float32)
    wq2 = jax.random.normal(k5, (din2, dout2), jnp.float32) * 0.2
    wk2 = jax.random.normal(k6, (din2, dout2), jnp.float32) * 0.2
    wv2 = jax.random.normal(k7, (din2, dout2), jnp.float32) * 0.2
    ref2 = reference(x2, wq2, wk2, wv2)

    out2_f32 = jax.block_until_ready(
        causal_attention(x2, wq2, wk2, wv2, mxu_dtype=jnp.float32, tile_cap=128))
    assert out2_f32.shape == (B2, T2, dout2)
    assert jnp.allclose(out2_f32, ref2, atol=1e-4, rtol=1e-4)

    out2_bf16 = jax.block_until_ready(
        causal_attention(x2, wq2, wk2, wv2, tile_cap=128))     # bf16 MXU, multi-tile
    assert jnp.allclose(out2_bf16, ref2, atol=2e-2, rtol=2e-2)

    print("KERNEL_OK")
</pallas_src>

<mosaic_0001>
module attributes {stable_mosaic.version = 11 : i64} {
  func.func @_qkv_proj_kernel(%arg0: i32, %arg1: i32, %arg2: memref<1x6x3xf32, #tpu.memory_space<vmem>>, %arg3: memref<3x384xf32, #tpu.memory_space<vmem>>, %arg4: memref<1x6x128xf32, #tpu.memory_space<vmem>>, %arg5: memref<1x6x128xf32, #tpu.memory_space<vmem>>, %arg6: memref<1x6x128xf32, #tpu.memory_space<vmem>>) attributes {dimension_semantics = [#tpu.dimension_semantics<parallel>, #tpu.dimension_semantics<parallel>], iteration_bounds = array<i64: 2, 1>, scalar_prefetch = 0 : i64, scratch_operands = 0 : i64, tpu.core_type = #tpu.core_type<tc>, window_params = [{transform_indices = @transform_0, window_bounds = array<i64: 1, 6, 3>}, {pipeline_mode = #tpu.pipeline_mode<synchronous>, transform_indices = @transform_1, window_bounds = array<i64: 3, 384>}, {transform_indices = @transform_2, window_bounds = array<i64: 1, 6, 128>}, {transform_indices = @transform_3, window_bounds = array<i64: 1, 6, 128>}, {transform_indices = @transform_4, window_bounds = array<i64: 1, 6, 128>}]} {
    %c0 = arith.constant 0 : index
    %c0_0 = arith.constant 0 : index
    %c0_1 = arith.constant 0 : index
    %0 = vector.load %arg2[%c0, %c0_0, %c0_1] : memref<1x6x3xf32, #tpu.memory_space<vmem>>, vector<1x6x3xf32>
    %1 = vector.shape_cast %0 : vector<1x6x3xf32> to vector<6x3xf32>
    %c0_2 = arith.constant 0 : index
    %c0_3 = arith.constant 0 : index
    %2 = vector.load %arg3[%c0_2, %c0_3] : memref<3x384xf32, #tpu.memory_space<vmem>>, vector<3x384xf32>
    %cst = arith.constant dense<0.000000e+00> : vector<6x384xf32>
    %3 = tpu.matmul %1, %2, %cst {dimension_numbers = #tpu.dot_dimension_numbers<[1], [0], [0], [1], [0, 0, 1, 1], [], []>} : vector<6x3xf32>, vector<3x384xf32>, vector<6x384xf32> -> vector<6x384xf32>
    %4 = vector.extract_strided_slice %3 {offsets = [0, 0], sizes = [6, 128], strides = [1, 1]} : vector<6x384xf32> to vector<6x128xf32>
    %c0_4 = arith.constant 0 : index
    %c0_5 = arith.constant 0 : index
    %c0_6 = arith.constant 0 : index
    %5 = vector.load %arg4[%c0_4, %c0_5, %c0_6] : memref<1x6x128xf32, #tpu.memory_space<vmem>>, vector<1x6x128xf32>
    %6 = vector.shape_cast %5 : vector<1x6x128xf32> to vector<6x128xf32>
    %7 = vector.shape_cast %4 : vector<6x128xf32> to vector<1x6x128xf32>
    tpu.vector_store %arg4[%c0_4, %c0_5, %c0_6], %7 {strides = array<i32>} : memref<1x6x128xf32, #tpu.memory_space<vmem>>, vector<1x6x128xf32>,
    %8 = vector.extract_strided_slice %3 {offsets = [0, 128], sizes = [6, 128], strides = [1, 1]} : vector<6x384xf32> to vector<6x128xf32>
    %c0_7 = arith.constant 0 : index
    %c0_8 = arith.constant 0 : index
    %c0_9 = arith.constant 0 : index
    %9 = vector.load %arg5[%c0_7, %c0_8, %c0_9] : memref<1x6x128xf32, #tpu.memory_space<vmem>>, vector<1x6x128xf32>
    %10 = vector.shape_cast %9 : vector<1x6x128xf32> to vector<6x128xf32>
    %11 = vector.shape_cast %8 : vector<6x128xf32> to vector<1x6x128xf32>
    tpu.vector_store %arg5[%c0_7, %c0_8, %c0_9], %11 {strides = array<i32>} : memref<1x6x128xf32, #tpu.memory_space<vmem>>, vector<1x6x128xf32>,
    %12 = vector.extract_strided_slice %3 {offsets = [0, 256], sizes = [6, 128], strides = [1, 1]} : vector<6x384xf32> to vector<6x128xf32>
    %c0_10 = arith.constant 0 : index
    %c0_11 = arith.constant 0 : index
    %c0_12 = arith.constant 0 : index
    %13 = vector.load %arg6[%c0_10, %c0_11, %c0_12] : memref<1x6x128xf32, #tpu.memory_space<vmem>>, vector<1x6x128xf32>
    %14 = vector.shape_cast %13 : vector<1x6x128xf32> to vector<6x128xf32>
    %15 = vector.shape_cast %12 : vector<6x128xf32> to vector<1x6x128xf32>
    tpu.vector_store %arg6[%c0_10, %c0_11, %c0_12], %15 {strides = array<i32>} : memref<1x6x128xf32, #tpu.memory_space<vmem>>, vector<1x6x128xf32>,
    return
  }
  func.func @transform_0(%arg0: i32, %arg1: i32) -> (i32, i32, i32) {
    %c0_i32 = arith.constant 0 : i32
    %c0_i32_0 = arith.constant 0 : i32
    return %arg0, %arg1, %c0_i32 : i32, i32, i32
  }
  func.func @transform_1(%arg0: i32, %arg1: i32) -> (i32, i32) {
    %c0_i32 = arith.constant 0 : i32
    %c0_i32_0 = arith.constant 0 : i32
    %c0_i32_1 = arith.constant 0 : i32
    return %c0_i32, %c0_i32_0 : i32, i32
  }
  func.func @transform_2(%arg0: i32, %arg1: i32) -> (i32, i32, i32) {
    %c0_i32 = arith.constant 0 : i32
    %c0_i32_0 = arith.constant 0 : i32
    return %arg0, %arg1, %c0_i32 : i32, i32, i32
  }
  func.func @transform_3(%arg0: i32, %arg1: i32) -> (i32, i32, i32) {
    %c0_i32 = arith.constant 0 : i32
    %c0_i32_0 = arith.constant 0 : i32
    return %arg0, %arg1, %c0_i32 : i32, i32, i32
  }
  func.func @transform_4(%arg0: i32, %arg1: i32) -> (i32, i32, i32) {
    %c0_i32 = arith.constant 0 : i32
    %c0_i32_0 = arith.constant 0 : i32
    return %arg0, %arg1, %c0_i32 : i32, i32, i32
  }
}

</mosaic_0001>

<llo_original>
// kernel: tpu_custom_call.1
$region0: #{tpu_custom_call.1}
  #allocation0 [shape = 'u32[]', space=smem, size = 0x4, offset = 0x4, fixed_abs, tag = 'smem constant byte address 0x4 - core index']
  #allocation1 [shape = 'u32[144,128]{1,0:T(1,128)}', space=vmem, size = 0x12000, scoped, tag = 'internal scratch']
  %s0 = inlined_call_operand.vmem [shape: f32[2,6,3], index: 0, kind: input, shape index: {}]
  %s1 = inlined_call_operand.vmem [shape: f32[3,384], index: 1, kind: input, shape index: {}]
  %s2 = inlined_call_operand.vmem [shape: f32[2,6,128], index: 2, kind: output, shape index: {0}]
  %s3 = inlined_call_operand.vmem [shape: f32[2,6,128], index: 3, kind: output, shape index: {1}]
  %s4 = inlined_call_operand.vmem [shape: f32[2,6,128], index: 4, kind: output, shape index: {2}]
  %5 = xla_tuple %s2, %s3, %s4
  %s6 = sld [smem:[#allocation0]]
  $region57: #{tpu_custom_call.1} parent=0
    _
  %s8 = ssub.s32 1, %s6
  %s9 = scalar_select 0, %s8, %s6
  loop: start=0, step=1, limit=4
  $region2: #{tpu_custom_call.1} parent=0 // loop_pre_header
    _
  $region3: #{tpu_custom_call.1} parent=0 // loop_header
    %s11 = sphi 0, %s15
    %p12 = scmp.ge.s32.totalorder %s11, 4
    %s18 = sphi 0, %s30
    %s19 = sphi 0, %s26
    %s20 = sphi 0, %s18
    %s21 = sphi 0, %s19
    %s22 = sphi 0, %s20
    %s23 = sphi 0, %s21
    %s35 = sphi 0, %s37
    %s38 = sphi 0, %s35
    %s39 = sphi 0, %s38
    %s55 = sphi 0, %s39
    %s59 = sphi 0, %s59
    %s61 = sphi 0, %s59
    %s62 = sphi 0, %s61
    %s76 = sphi 0, %s62
    %s84 = sphi 0, %s86
    %s87 = sphi 0, %s84
    %s88 = sphi 0, %s87
    %s104 = sphi 0, %s88
    %s112 = sphi 0, %s114
    %s115 = sphi 0, %s112
    %s116 = sphi 0, %s115
    %s132 = sphi 0, %s116
    %s140 = sphi 0, %s142
    %s143 = sphi 0, %s140
    %s144 = sphi 0, %s143
    %s160 = sphi 0, %s144
  $region4: #{tpu_custom_call.1} parent=0 // loop_header_branch
    %14 = sbr.rel (%p12) target = $region8
  $region5: #{tpu_custom_call.1} parent=0 // loop_body
    %s16 = ssub.s32 %s11, 1
    %s17 = ssub.s32 %s11, 2
    %s24 = sadd.s32 1, %s19
    %p25 = scmp.ge.s32.totalorder %s24, 1
    %s26 = scalar_select %p25, 0, %s24
    %s27 = sadd.s32 1, %s18
    %s28 = scalar_select %p25, %s27, %s18
    %p29 = scmp.ge.s32.totalorder %s28, 2
    %s30 = scalar_select %p29, 0, %s28
    %s31 = ssub.s32 %s18, %s30
    %s32 = ssub.s32 %s19, %s26
    %s33 = sor.u32 %s31, %s32
    %p34 = scmp.eq.s32.totalorder %s33, 0
    %s36 = sadd.s32 %s35, 1
    %s37 = scalar_select %p34, %s35, %s36
    %p40 = pneg %p34
    %p41 = scmp.eq.s32.totalorder %s11, 1
    %p42 = por %p40, %p41
    %p43 = scmp.ne.s32.totalorder %s35, %s38
    %p44 = scmp.eq.s32.totalorder %s11, 0
    %p45 = por %p43, %p44
    %p46 = scmp.ne.s32.totalorder %s35, %s38
    %p47 = scmp.eq.s32.totalorder %s16, 1
    %p48 = por %p46, %p47
    %p49 = scmp.ne.s32.totalorder %s38, %s39
    %p50 = scmp.eq.s32.totalorder %s16, 0
    %p51 = por %p49, %p50
    %p52 = scmp.ne.s32.totalorder %s38, %s39
    %p53 = scmp.eq.s32.totalorder %s17, 1
    %p54 = por %p52, %p53
    %p56 = scmp.ne.s32.totalorder %s39, %s55
    %p57 = scmp.eq.s32.totalorder %s17, 0
    %p58 = por %p56, %p57
    %s60 = sadd.s32 %s59, 1
    %p63 = scmp.eq.s32.totalorder %s11, 1
    %p64 = scmp.ne.s32.totalorder %s59, %s61
    %p65 = scmp.eq.s32.totalorder %s11, 0
    %p66 = por %p64, %p65
    %p67 = scmp.ne.s32.totalorder %s59, %s61
    %p68 = scmp.eq.s32.totalorder %s16, 1
    %p69 = por %p67, %p68
    %p70 = scmp.ne.s32.totalorder %s61, %s62
    %p71 = scmp.eq.s32.totalorder %s16, 0
    %p72 = por %p70, %p71
    %p73 = scmp.ne.s32.totalorder %s61, %s62
    %p74 = scmp.eq.s32.totalorder %s17, 1
    %p75 = por %p73, %p74
    %p77 = scmp.ne.s32.totalorder %s62, %s76
    %p78 = scmp.eq.s32.totalorder %s17, 0
    %p79 = por %p77, %p78
    %s80 = ssub.s32 %s18, %s30
    %s81 = ssub.s32 %s19, %s26
    %s82 = sor.u32 %s80, %s81
    %p83 = scmp.eq.s32.totalorder %s82, 0
    %s85 = sadd.s32 %s84, 1
    %s86 = scalar_select %p83, %s84, %s85
    %p89 = pneg %p83
    %p90 = scmp.eq.s32.totalorder %s11, 1
    %p91 = por %p89, %p90
    %p92 = scmp.ne.s32.totalorder %s84, %s87
    %p93 = scmp.eq.s32.totalorder %s11, 0
    %p94 = por %p92, %p93
    %p95 = scmp.ne.s32.totalorder %s84, %s87
    %p96 = scmp.eq.s32.totalorder %s16, 1
    %p97 = por %p95, %p96
    %p98 = scmp.ne.s32.totalorder %s87, %s88
    %p99 = scmp.eq.s32.totalorder %s16, 0
    %p100 = por %p98, %p99
    %p101 = scmp.ne.s32.totalorder %s87, %s88
    %p102 = scmp.eq.s32.totalorder %s17, 1
    %p103 = por %p101, %p102
    %p105 = scmp.ne.s32.totalorder %s88, %s104
    %p106 = scmp.eq.s32.totalorder %s17, 0
    %p107 = por %p105, %p106
    %s108 = ssub.s32 %s18, %s30
    %s109 = ssub.s32 %s19, %s26
    %s110 = sor.u32 %s108, %s109
    %p111 = scmp.eq.s32.totalorder %s110, 0
    %s113 = sadd.s32 %s112, 1
    %s114 = scalar_select %p111, %s112, %s113
    %p117 = pneg %p111
    %p118 = scmp.eq.s32.totalorder %s11, 1
    %p119 = por %p117, %p118
    %p120 = scmp.ne.s32.totalorder %s112, %s115
    %p121 = scmp.eq.s32.totalorder %s11, 0
    %p122 = por %p120, %p121
    %p123 = scmp.ne.s32.totalorder %s112, %s115
    %p124 = scmp.eq.s32.totalorder %s16, 1
    %p125 = por %p123, %p124
    %p126 = scmp.ne.s32.totalorder %s115, %s116
    %p127 = scmp.eq.s32.totalorder %s16, 0
    %p128 = por %p126, %p127
    %p129 = scmp.ne.s32.totalorder %s115, %s116
    %p130 = scmp.eq.s32.totalorder %s17, 1
    %p131 = por %p129, %p130
    %p133 = scmp.ne.s32.totalorder %s116, %s132
    %p134 = scmp.eq.s32.totalorder %s17, 0
    %p135 = por %p133, %p134
    %s136 = ssub.s32 %s18, %s30
    %s137 = ssub.s32 %s19, %s26
    %s138 = sor.u32 %s136, %s137
    %p139 = scmp.eq.s32.totalorder %s138, 0
    %s141 = sadd.s32 %s140, 1
    %s142 = scalar_select %p139, %s140, %s141
    %p145 = pneg %p139
    %p146 = scmp.eq.s32.totalorder %s11, 1
    %p147 = por %p145, %p146
    %p148 = scmp.ne.s32.totalorder %s140, %s143
    %p149 = scmp.eq.s32.totalorder %s11, 0
    %p150 = por %p148, %p149
    %p151 = scmp.ne.s32.totalorder %s140, %s143
    %p152 = scmp.eq.s32.totalorder %s16, 1
    %p153 = por %p151, %p152
    %p154 = scmp.ne.s32.totalorder %s143, %s144
    %p155 = scmp.eq.s32.totalorder %s16, 0
    %p156 = por %p154, %p155
    %p157 = scmp.ne.s32.totalorder %s143, %s144
    %p158 = scmp.eq.s32.totalorder %s17, 1
    %p159 = por %p157, %p158
    %p161 = scmp.ne.s32.totalorder %s144, %s160
    %p162 = scmp.eq.s32.totalorder %s17, 0
    %p163 = por %p161, %p162
    %p164 = scmp.le.s32.totalorder 1, %s11
    %p165 = scmp.lt.s32.totalorder %s11, 3
    %p166 = pnand %p164, %p165
    %p167 = pneg %p166
    // Predicated region
    $region9: #{tpu_custom_call.1} parent=5 // pred_check
      _
    $region10: #{tpu_custom_call.1} parent=5 // pred_check_branch
      %169 = sbr.rel (%p166) target = $region12
    $region11: #{tpu_custom_call.1} parent=5 // pred_region
      %s170 = ssub.s32 %s11, 1
      // Predicated region
      $region13: #{tpu_custom_call.1} parent=11 // pred_check
        %p171 = pneg %p72
      $region14: #{tpu_custom_call.1} parent=11 // pred_check_branch
        %173 = sbr.rel (%p171) target = $region16
      $region15: #{tpu_custom_call.1} parent=11 // pred_region
        _
      $region16: #{tpu_custom_call.1} parent=11 // pred_fallthru
        _
    $region12: #{tpu_custom_call.1} parent=5 // pred_fallthru
      _
    %p174 = scmp.lt.s32.totalorder %s11, 2
    // Predicated region
    $region17: #{tpu_custom_call.1} parent=5 // pred_check
      %p175 = pneg %p174
    $region18: #{tpu_custom_call.1} parent=5 // pred_check_branch
      %177 = sbr.rel (%p175) target = $region20
    $region19: #{tpu_custom_call.1} parent=5 // pred_region
      // Predicated region
      $region21: #{tpu_custom_call.1} parent=19 // pred_check
        %p178 = pneg %p45
      $region22: #{tpu_custom_call.1} parent=19 // pred_check_branch
        %180 = sbr.rel (%p178) target = $region24
      $region23: #{tpu_custom_call.1} parent=19 // pred_region
        %p181 = scmp.lt.s32.totalorder %s18, 1
        %s182 = scalar_select %p181, %s18, 1
        %p183 = scmp.lt.s32.totalorder %s19, 0
        %s184 = scalar_select %p183, %s19, 0
        %s185 = sadd.s32 %s184, %s182
        %s186 = smul.addr %s185, 8
        %s187 = scalar_lea.vmem %s0, %s186
      $region24: #{tpu_custom_call.1} parent=19 // pred_fallthru
        _
    $region20: #{tpu_custom_call.1} parent=5 // pred_fallthru
      _
    %p188 = scmp.le.s32.totalorder 1, %s11
    %p189 = scmp.lt.s32.totalorder %s11, 3
    %p190 = pnand %p188, %p189
    %p191 = pneg %p190
    // Predicated region
    $region25: #{tpu_custom_call.1} parent=5 // pred_check
      _
    $region26: #{tpu_custom_call.1} parent=5 // pred_check_branch
      %193 = sbr.rel (%p190) target = $region28
    $region27: #{tpu_custom_call.1} parent=5 // pred_region
      %s194 = ssub.s32 %s11, 1
      %p195 = scmp.lt.s32.totalorder %s20, 1
      %s196 = scalar_select %p195, %s20, 1
      %p197 = scmp.lt.s32.totalorder %s21, 0
      %s198 = scalar_select %p197, %s21, 0
      %s199 = sadd.s32 %s198, %s196
      %s200 = smul.addr %s199, 8
      %s201 = scalar_lea.vmem %s0, %s200
      %p202 = pneg %p51
      %p203 = pneg %p48
      %p204 = pneg %p72
      %p205 = pneg %p69
      %p206 = pneg %p100
      %p207 = pneg %p97
      %p208 = scmp.lt.s32.totalorder %s20, 1
      %s209 = scalar_select %p208, %s20, 1
      %p210 = scmp.lt.s32.totalorder %s21, 0
      %s211 = scalar_select %p210, %s21, 0
      %s212 = sadd.s32 %s211, %s209
      %s213 = smul.addr %s212, 8
      %s214 = scalar_lea.vmem %s2, %s213
      %p215 = pneg %p128
      %p216 = pneg %p125
      %p217 = scmp.lt.s32.totalorder %s20, 1
      %s218 = scalar_select %p217, %s20, 1
      %p219 = scmp.lt.s32.totalorder %s21, 0
      %s220 = scalar_select %p219, %s21, 0
      %s221 = sadd.s32 %s220, %s218
      %s222 = smul.addr %s221, 8
      %s223 = scalar_lea.vmem %s3, %s222
      %p224 = pneg %p156
      %p225 = pneg %p153
      %p226 = scmp.lt.s32.totalorder %s20, 1
      %s227 = scalar_select %p226, %s20, 1
      %p228 = scmp.lt.s32.totalorder %s21, 0
      %s229 = scalar_select %p228, %s21, 0
      %s230 = sadd.s32 %s229, %s227
      %s231 = smul.addr %s230, 8
      %s232 = scalar_lea.vmem %s4, %s231
      %p233 = scmp.lt.s32.totalorder %s20, 1
      %s234 = scalar_select %p233, %s20, 1
      %p235 = scmp.lt.s32.totalorder %s21, 0
      %s236 = scalar_select %p235, %s21, 0
      %s237 = sadd.s32 %s236, %s234
      %s238 = smul.addr %s237, 8
      %s239 = scalar_lea.vmem %s0, %s238
      %p240 = scmp.lt.s32.totalorder %s20, 1
      %s241 = scalar_select %p240, %s20, 1
      %p242 = scmp.lt.s32.totalorder %s21, 0
      %s243 = scalar_select %p242, %s21, 0
      %s244 = sadd.s32 %s243, %s241
      %s245 = smul.addr %s244, 8
      %s246 = scalar_lea.vmem %s2, %s245
      %p247 = scmp.lt.s32.totalorder %s20, 1
      %s248 = scalar_select %p247, %s20, 1
      %p249 = scmp.lt.s32.totalorder %s21, 0
      %s250 = scalar_select %p249, %s21, 0
      %s251 = sadd.s32 %s250, %s248
      %s252 = smul.addr %s251, 8
      %s253 = scalar_lea.vmem %s3, %s252
      %p254 = scmp.lt.s32.totalorder %s20, 1
      %s255 = scalar_select %p254, %s20, 1
      %p256 = scmp.lt.s32.totalorder %s21, 0
      %s257 = scalar_select %p256, %s21, 0
      %s258 = sadd.s32 %s257, %s255
      %s259 = smul.addr %s258, 8
      %s260 = scalar_lea.vmem %s4, %s259
      %v261 = vld [vmem:[%s239] sm:$0x3f]
      %v262 = vld [vmem:[%s1] sm:$0x77]
      %v263 = vld [vmem:[%s1 + $0x8] sm:$0x7]
      %v266 = vcombine.high %v262, %v262
      %vm267 = vcmask 23552
      %v269 = vsel %vm267, %v261, 0
      %vm271 = vcmask 1042432
      %v272 = vsel %vm271, %v262, 0
      %v274 = vsel %vm271, %v266, 0
      %v276 = vsel %vm271, %v263, 0
      %278 = vmatprep.subr.mxu0 %v274
      %279 = vmatpush1.msra.mxu0 %v272
      %280 = vmatprep.subr.mxu0 0.0
      %281 = vmatpush1.msra.mxu0 0.0
      %282 = vmatprep.subr.mxu0 0.0
      %283 = vmatpush1.msra.mxu0 0.0
      %284 = vmatprep.subr.mxu0 0.0
      %285 = vmatpush1.msra.mxu0 0.0
      %286 = vmatprep.subr.mxu0 0.0
      %287 = vmatpush1.msra.mxu0 0.0
      %288 = vmatprep.subr.mxu0 0.0
      %289 = vmatpush1.msra.mxu0 0.0
      %290 = vmatprep.subr.mxu0 0.0
      %291 = vmatpush1.msra.mxu0 0.0
      %292 = vmatprep.subr.mxu0 0.0
      %293 = vmatpush1.msra.mxu0 0.0
      %294 = vmatprep.subr.mxu0 0.0
      %295 = vmatpush1.msra.mxu0 0.0
      %296 = vmatprep.subr.mxu0 0.0
      %297 = vmatpush1.msra.mxu0 0.0
      %298 = vmatprep.subr.mxu0 0.0
      %299 = vmatpush1.msra.mxu0 0.0
      %300 = vmatprep.subr.mxu0 0.0
      %301 = vmatpush1.msra.mxu0 0.0
      %302 = vmatprep.subr.mxu0 0.0
      %303 = vmatpush1.msra.mxu0 0.0
      %304 = vmatprep.subr.mxu0 0.0
      %305 = vmatpush1.msra.mxu0 0.0
      %306 = vmatprep.subr.mxu0 0.0
      %307 = vmatpush1.msra.mxu0 0.0
      %308 = vmatprep.subr.mxu0 0.0
      %309 = vmatpush1.msra.mxu0 0.0
      %310 = vmatprep.subr.mxu0 0.0
      %311 = vmatpush1.msra.mxu0 0.0
      %312 = vmatprep.subr.mxu0 0.0
      %313 = vmatpush1.msra.mxu0 0.0
      %314 = vmatprep.subr.mxu0 0.0
      %315 = vmatpush1.msra.mxu0 0.0
      %316 = vmatprep.subr.mxu0 0.0
      %317 = vmatpush1.msra.mxu0 0.0
      %318 = vmatprep.subr.mxu0 0.0
      %319 = vmatpush1.msra.mxu0 0.0
      %320 = vmatprep.subr.mxu0 0.0
      %321 = vmatpush1.msra.mxu0 0.0
      %322 = vmatprep.subr.mxu0 0.0
      %323 = vmatpush1.msra.mxu0 0.0
      %324 = vmatprep.subr.mxu0 0.0
      %325 = vmatpush1.msra.mxu0 0.0
      %326 = vmatprep.subr.mxu0 0.0
      %327 = vmatpush1.msra.mxu0 0.0
      %328 = vmatprep.subr.mxu0 0.0
      %329 = vmatpush1.msra.mxu0 0.0
      %330 = vmatprep.subr.mxu0 0.0
      %331 = vmatpush1.msra.mxu0 0.0
      %332 = vmatprep.subr.mxu0 0.0
      %333 = vmatpush1.msra.mxu0 0.0
      %334 = vmatprep.subr.mxu0 0.0
      %335 = vmatpush1.msra.mxu0 0.0
      %336 = vmatprep.subr.mxu0 0.0
      %337 = vmatpush1.msra.mxu0 0.0
      %338 = vmatprep.subr.mxu0 0.0
      %339 = vmatpush1.msra.mxu0 0.0
      %340 = vmatprep.subr.mxu0 0.0
      %341 = vmatpush1.msra.mxu0 0.0
      %342 = vmatprep.mubr.f32.mxu0 0.0
      %343 = vmatmul.mubr.f32.gmra.mrb[0].mxu0 %v269
      %v344 = vpop.f32.mrb[0].mxu0
      %v345 = vadd.f32 0.0, %v344
      %v346 = vpop.f32.mrb[0].mxu0
      %v347 = vadd.f32 0.0, %v346
      %348 = vdwg.mxu0
      %349 = vmatprep.subr.mxu0 0.0
      %350 = vmatpush1.msra.mxu0 %v276
      %351 = vmatprep.subr.mxu0 0.0
      %352 = vmatpush1.msra.mxu0 0.0
      %353 = vmatprep.subr.mxu0 0.0
      %354 = vmatpush1.msra.mxu0 0.0
      %355 = vmatprep.subr.mxu0 0.0
      %356 = vmatpush1.msra.mxu0 0.0
      %357 = vmatprep.subr.mxu0 0.0
      %358 = vmatpush1.msra.mxu0 0.0
      %359 = vmatprep.subr.mxu0 0.0
      %360 = vmatpush1.msra.mxu0 0.0
      %361 = vmatprep.subr.mxu0 0.0
      %362 = vmatpush1.msra.mxu0 0.0
      %363 = vmatprep.subr.mxu0 0.0
      %364 = vmatpush1.msra.mxu0 0.0
      %365 = vmatprep.subr.mxu0 0.0
      %366 = vmatpush1.msra.mxu0 0.0
      %367 = vmatprep.subr.mxu0 0.0
      %368 = vmatpush1.msra.mxu0 0.0
      %369 = vmatprep.subr.mxu0 0.0
      %370 = vmatpush1.msra.mxu0 0.0
      %371 = vmatprep.subr.mxu0 0.0
      %372 = vmatpush1.msra.mxu0 0.0
      %373 = vmatprep.subr.mxu0 0.0
      %374 = vmatpush1.msra.mxu0 0.0
      %375 = vmatprep.subr.mxu0 0.0
      %376 = vmatpush1.msra.mxu0 0.0
      %377 = vmatprep.subr.mxu0 0.0
      %378 = vmatpush1.msra.mxu0 0.0
      %379 = vmatprep.subr.mxu0 0.0
      %380 = vmatpush1.msra.mxu0 0.0
      %381 = vmatprep.subr.mxu0 0.0
      %382 = vmatpush1.msra.mxu0 0.0
      %383 = vmatprep.subr.mxu0 0.0
      %384 = vmatpush1.msra.mxu0 0.0
      %385 = vmatprep.subr.mxu0 0.0
      %386 = vmatpush1.msra.mxu0 0.0
      %387 = vmatprep.subr.mxu0 0.0
      %388 = vmatpush1.msra.mxu0 0.0
      %389 = vmatprep.subr.mxu0 0.0
      %390 = vmatpush1.msra.mxu0 0.0
      %391 = vmatprep.subr.mxu0 0.0
      %392 = vmatpush1.msra.mxu0 0.0
      %393 = vmatprep.subr.mxu0 0.0
      %394 = vmatpush1.msra.mxu0 0.0
      %395 = vmatprep.subr.mxu0 0.0
      %396 = vmatpush1.msra.mxu0 0.0
      %397 = vmatprep.subr.mxu0 0.0
      %398 = vmatpush1.msra.mxu0 0.0
      %399 = vmatprep.subr.mxu0 0.0
      %400 = vmatpush1.msra.mxu0 0.0
      %401 = vmatprep.subr.mxu0 0.0
      %402 = vmatpush1.msra.mxu0 0.0
      %403 = vmatprep.subr.mxu0 0.0
      %404 = vmatpush1.msra.mxu0 0.0
      %405 = vmatprep.subr.mxu0 0.0
      %406 = vmatpush1.msra.mxu0 0.0
      %407 = vmatprep.subr.mxu0 0.0
      %408 = vmatpush1.msra.mxu0 0.0
      %409 = vmatprep.subr.mxu0 0.0
      %410 = vmatpush1.msra.mxu0 0.0
      %411 = vmatprep.subr.mxu0 0.0
      %412 = vmatpush1.msra.mxu0 0.0
      %413 = vmatprep.mubr.f32.mxu0 0.0
      %414 = vmatmul.mubr.f32.gmra.mrb[0].mxu0 %v269
      %v415 = vpop.f32.mrb[0].mxu0
      %v416 = vadd.f32 0.0, %v415
      %v417 = vpop.f32.mrb[0].mxu0
      %418 = vdwg.mxu0
      %419 = vst [vmem:[%s246] sm:$0x3f] %v345
      %420 = vst [vmem:[%s253] sm:$0x3f] %v347
      %421 = vst [vmem:[%s260] sm:$0x3f] %v416
      %p422 = scmp.lt.s32.totalorder %s20, 1
      %s423 = scalar_select %p422, %s20, 1
      %p424 = scmp.lt.s32.totalorder %s21, 0
      %s425 = scalar_select %p424, %s21, 0
      %s426 = sadd.s32 %s425, %s423
      %s427 = smul.addr %s426, 8
      %s428 = scalar_lea.vmem %s2, %s427
      %p429 = scmp.lt.s32.totalorder %s20, 1
      %s430 = scalar_select %p429, %s20, 1
      %p431 = scmp.lt.s32.totalorder %s21, 0
      %s432 = scalar_select %p431, %s21, 0
      %s433 = sadd.s32 %s432, %s430
      %s434 = smul.addr %s433, 8
      %s435 = scalar_lea.vmem %s3, %s434
      %p436 = scmp.lt.s32.totalorder %s20, 1
      %s437 = scalar_select %p436, %s20, 1
      %p438 = scmp.lt.s32.totalorder %s21, 0
      %s439 = scalar_select %p438, %s21, 0
      %s440 = sadd.s32 %s439, %s437
      %s441 = smul.addr %s440, 8
      %s442 = scalar_lea.vmem %s4, %s441
      // Predicated region
      $region29: #{tpu_custom_call.1} parent=27 // pred_check
        %p443 = pneg %p97
      $region30: #{tpu_custom_call.1} parent=27 // pred_check_branch
        %445 = sbr.rel (%p443) target = $region32
      $region31: #{tpu_custom_call.1} parent=27 // pred_region
        _
      $region32: #{tpu_custom_call.1} parent=27 // pred_fallthru
        _
      // Predicated region
      $region33: #{tpu_custom_call.1} parent=27 // pred_check
        %p446 = pneg %p125
      $region34: #{tpu_custom_call.1} parent=27 // pred_check_branch
        %448 = sbr.rel (%p446) target = $region36
      $region35: #{tpu_custom_call.1} parent=27 // pred_region
        _
      $region36: #{tpu_custom_call.1} parent=27 // pred_fallthru
        _
      // Predicated region
      $region37: #{tpu_custom_call.1} parent=27 // pred_check
        %p449 = pneg %p153
      $region38: #{tpu_custom_call.1} parent=27 // pred_check_branch
        %451 = sbr.rel (%p449) target = $region40
      $region39: #{tpu_custom_call.1} parent=27 // pred_region
        _
      $region40: #{tpu_custom_call.1} parent=27 // pred_fallthru
        _
    $region28: #{tpu_custom_call.1} parent=5 // pred_fallthru
      _
    %p452 = scmp.le.s32.totalorder 2, %s11
    // Predicated region
    $region41: #{tpu_custom_call.1} parent=5 // pred_check
      %p453 = pneg %p452
    $region42: #{tpu_custom_call.1} parent=5 // pred_check_branch
      %455 = sbr.rel (%p453) target = $region44
    $region43: #{tpu_custom_call.1} parent=5 // pred_region
      %s456 = ssub.s32 %s11, 2
      // Predicated region
      $region45: #{tpu_custom_call.1} parent=43 // pred_check
        %p457 = pneg %p103
      $region46: #{tpu_custom_call.1} parent=43 // pred_check_branch
        %459 = sbr.rel (%p457) target = $region48
      $region47: #{tpu_custom_call.1} parent=43 // pred_region
        %p460 = scmp.lt.s32.totalorder %s22, 1
        %s461 = scalar_select %p460, %s22, 1
        %p462 = scmp.lt.s32.totalorder %s23, 0
        %s463 = scalar_select %p462, %s23, 0
        %s464 = sadd.s32 %s463, %s461
        %s465 = smul.addr %s464, 8
        %s466 = scalar_lea.vmem %s2, %s465
      $region48: #{tpu_custom_call.1} parent=43 // pred_fallthru
        _
      // Predicated region
      $region49: #{tpu_custom_call.1} parent=43 // pred_check
        %p467 = pneg %p131
      $region50: #{tpu_custom_call.1} parent=43 // pred_check_branch
        %469 = sbr.rel (%p467) target = $region52
      $region51: #{tpu_custom_call.1} parent=43 // pred_region
        %p470 = scmp.lt.s32.totalorder %s22, 1
        %s471 = scalar_select %p470, %s22, 1
        %p472 = scmp.lt.s32.totalorder %s23, 0
        %s473 = scalar_select %p472, %s23, 0
        %s474 = sadd.s32 %s473, %s471
        %s475 = smul.addr %s474, 8
        %s476 = scalar_lea.vmem %s3, %s475
      $region52: #{tpu_custom_call.1} parent=43 // pred_fallthru
        _
      // Predicated region
      $region53: #{tpu_custom_call.1} parent=43 // pred_check
        %p477 = pneg %p159
      $region54: #{tpu_custom_call.1} parent=43 // pred_check_branch
        %479 = sbr.rel (%p477) target = $region56
      $region55: #{tpu_custom_call.1} parent=43 // pred_region
        %p480 = scmp.lt.s32.totalorder %s22, 1
        %s481 = scalar_select %p480, %s22, 1
        %p482 = scmp.lt.s32.totalorder %s23, 0
        %s483 = scalar_select %p482, %s23, 0
        %s484 = sadd.s32 %s483, %s481
        %s485 = smul.addr %s484, 8
        %s486 = scalar_lea.vmem %s4, %s485
      $region56: #{tpu_custom_call.1} parent=43 // pred_fallthru
        _
    $region44: #{tpu_custom_call.1} parent=5 // pred_fallthru
      _
  $region6: #{tpu_custom_call.1} parent=0 // loop_footer
    %s15 = sadd.s32 1, %s11
  $region7: #{tpu_custom_call.1} parent=0 // loop_footer_branch
    %10 = sbr.rel target = $region3
  $region8: #{tpu_custom_call.1} parent=0 // loop_exit
    _

</llo_original>
